<compile_context>
chip_gen: v5e
topology: v5e:2x2
jax: 0.10.0
libtpu: 0.0.40
codegen_flags: <defaults>
</compile_context>

<pallas_src>
import jax
import jax.numpy as jnp
from jax.experimental import pallas as pl
from jax.experimental.pallas import tpu as pltpu


def _round_up(a: int, b: int) -> int:
    return (a + b - 1) // b * b


def highway_kernel(x_ref, nonx_ref, w_ref, b_ref, o_ref):
    """One batch tile through all highway layers (weights resident in VMEM)."""
    num_layers = w_ref.shape[0]          # static
    op_dtype = w_ref.dtype               # bf16 weights -> bf16 MXU operands

    x = x_ref[...].astype(jnp.float32)
    non_x = nonx_ref[...].astype(jnp.float32)

    # Short stack -> statically unrolled so the LLO scheduler can interleave
    # matmul / EUP (sigmoid) / VALU work across layers.
    for l in range(num_layers):
        z = jnp.dot(x.astype(op_dtype), w_ref[l],
                    preferred_element_type=jnp.float32)
        z = z + b_ref[l].astype(jnp.float32)          # (1, Dp) broadcast
        gate = jax.nn.sigmoid(z)                      # f32 on the EUP
        x = x + gate * (non_x - x)                    # FMA-shaped gate combine

    o_ref[...] = x.astype(o_ref.dtype)


def highway(x, non_x, weights_t, biases, *, block_batch=256):
    """x, non_x: (batch, dim); weights_t: (L, dim_in, dim_out); biases: (L, 1, dim).

    Weights are the transposed torch layout so the kernel does x @ W directly.
    """
    B, D = x.shape
    L = weights_t.shape[0]

    # Lane-dense / tile-aligned padding (zero padding is exact for Highway:
    # padded weight rows/cols and biases are zero, padded activations stay 0
    # and are sliced off; padded weight rows cannot contaminate real columns).
    Dp = _round_up(max(D, 128), 128)
    tb = _round_up(min(block_batch, _round_up(max(B, 8), 8)), 8)
    Bp = _round_up(max(B, tb), tb)

    if (Bp, Dp) != (B, D):
        x = jnp.pad(x, ((0, Bp - B), (0, Dp - D)))
        non_x = jnp.pad(non_x, ((0, Bp - B), (0, Dp - D)))
    if Dp != D:
        weights_t = jnp.pad(weights_t, ((0, 0), (0, Dp - D), (0, Dp - D)))
        biases = jnp.pad(biases, ((0, 0), (0, 0), (0, Dp - D)))

    grid = (Bp // tb,)

    w_bytes = weights_t.size * weights_t.dtype.itemsize
    b_bytes = biases.size * biases.dtype.itemsize
    act_tile_f32 = tb * Dp * 4
    # resident weights + double-buffered streams + f32 in-kernel copies + margin
    vmem_limit = int(min(max(w_bytes + b_bytes + 8 * act_tile_f32 + (4 << 20),
                             16 << 20), 96 << 20))

    cost = pl.CostEstimate(
        flops=2 * L * Bp * Dp * Dp,
        transcendentals=L * Bp * Dp,
        bytes_accessed=int(3 * Bp * Dp * x.dtype.itemsize + w_bytes + b_bytes),
    )

    out = pl.pallas_call(
        highway_kernel,
        out_shape=jax.ShapeDtypeStruct((Bp, Dp), x.dtype),
        grid_spec=pltpu.PrefetchScalarGridSpec(
            num_scalar_prefetch=0,
            grid=grid,
            in_specs=[
                pl.BlockSpec((tb, Dp), lambda i: (i, 0)),       # x tile streams
                pl.BlockSpec((tb, Dp), lambda i: (i, 0)),       # non_x tile streams
                pl.BlockSpec((L, Dp, Dp), lambda i: (0, 0, 0)),  # weights resident
                pl.BlockSpec((L, 1, Dp), lambda i: (0, 0, 0)),   # biases resident
            ],
            out_specs=pl.BlockSpec((tb, Dp), lambda i: (i, 0)),
        ),
        compiler_params=pltpu.CompilerParams(
            dimension_semantics=("parallel",),
            vmem_limit_bytes=vmem_limit,
        ),
        cost_estimate=cost,
    )(x, non_x, weights_t, biases)

    return out[:B, :D]


def init_highway_params(key, dim, layer_num, dtype=jnp.float32):
    """torch nn.Linear default init: U[-1/sqrt(dim), 1/sqrt(dim)].

    Returns weights in torch layout (L, out, in) plus bias (L, dim)."""
    bound = 1.0 / jnp.sqrt(jnp.float32(dim))
    kw, kb = jax.random.split(key)
    w = jax.random.uniform(kw, (layer_num, dim, dim), dtype, -bound, bound)
    b = jax.random.uniform(kb, (layer_num, dim), dtype, -bound, bound)
    return w, b


def highway_reference(x, non_x, w_torch, b):
    """Pure-JAX f32 reference matching the PyTorch module exactly."""
    x = x.astype(jnp.float32)
    non_x = non_x.astype(jnp.float32)
    for l in range(w_torch.shape[0]):
        z = x @ w_torch[l].astype(jnp.float32).T + b[l].astype(jnp.float32)
        g = jax.nn.sigmoid(z)
        x = non_x * g + x * (1.0 - g)
    return x


def _run_case(key, batch, dim, layers, weight_dtype, atol, rtol):
    k_x, k_nx, k_p = jax.random.split(key, 3)
    x = jax.random.normal(k_x, (batch, dim), jnp.float32)
    non_x = jax.random.normal(k_nx, (batch, dim), jnp.float32)
    w_torch, b = init_highway_params(k_p, dim, layers)       # (L, out, in), (L, dim)

    w_torch = w_torch.astype(weight_dtype)
    b = b.astype(weight_dtype)
    w_t = jnp.transpose(w_torch, (0, 2, 1))                   # (L, in, out)
    b_k = b[:, None, :]                                       # (L, 1, dim)

    out = jax.block_until_ready(highway(x, non_x, w_t, b_k))
    ref = highway_reference(x, non_x, w_torch, b)
    assert out.shape == ref.shape == (batch, dim)
    assert jnp.allclose(out, ref, atol=atol, rtol=rtol), (
        f"mismatch: batch={batch} dim={dim} L={layers} dtype={weight_dtype}")


if __name__ == "__main__":
    key = jax.random.PRNGKey(0)
    k1, k2, k3 = jax.random.split(key, 3)

    # f32 weights, lane-aligned dim, multi-tile batch path.
    _run_case(k1, batch=64, dim=128, layers=3,
              weight_dtype=jnp.float32, atol=1e-5, rtol=1e-5)

    # Small / unaligned shape: exercises the pad-to-(8,128) wrapper path.
    _run_case(k2, batch=8, dim=32, layers=2,
              weight_dtype=jnp.float32, atol=1e-5, rtol=1e-5)

    # bf16 weights: bf16 MXU operands, f32 gate math (looser tolerance).
    _run_case(k3, batch=64, dim=128, layers=3,
              weight_dtype=jnp.bfloat16, atol=5e-2, rtol=5e-2)

    print("KERNEL_OK")
</pallas_src>

<mosaic_0001>
module attributes {stable_mosaic.version = 11 : i64} {
  func.func @highway_kernel(%arg0: i32, %arg1: memref<64x128xf32, #tpu.memory_space<vmem>>, %arg2: memref<64x128xf32, #tpu.memory_space<vmem>>, %arg3: memref<3x128x128xf32, #tpu.memory_space<vmem>>, %arg4: memref<3x1x128xf32, #tpu.memory_space<vmem>>, %arg5: memref<64x128xf32, #tpu.memory_space<vmem>>) attributes {dimension_semantics = [#tpu.dimension_semantics<parallel>], iteration_bounds = array<i64: 1>, scalar_prefetch = 0 : i64, scratch_operands = 0 : i64, tpu.core_type = #tpu.core_type<tc>, window_params = [{transform_indices = @transform_0, window_bounds = array<i64: 64, 128>}, {transform_indices = @transform_1, window_bounds = array<i64: 64, 128>}, {pipeline_mode = #tpu.pipeline_mode<synchronous>, transform_indices = @transform_2, window_bounds = array<i64: 3, 128, 128>}, {pipeline_mode = #tpu.pipeline_mode<synchronous>, transform_indices = @transform_3, window_bounds = array<i64: 3, 1, 128>}, {transform_indices = @transform_4, window_bounds = array<i64: 64, 128>}]} {
    %c0 = arith.constant 0 : index
    %c0_0 = arith.constant 0 : index
    %0 = vector.load %arg1[%c0, %c0_0] : memref<64x128xf32, #tpu.memory_space<vmem>>, vector<64x128xf32>
    %c0_1 = arith.constant 0 : index
    %c0_2 = arith.constant 0 : index
    %1 = vector.load %arg2[%c0_1, %c0_2] : memref<64x128xf32, #tpu.memory_space<vmem>>, vector<64x128xf32>
    %c0_3 = arith.constant 0 : index
    %c0_4 = arith.constant 0 : index
    %c0_5 = arith.constant 0 : index
    %2 = vector.load %arg3[%c0_3, %c0_4, %c0_5] : memref<3x128x128xf32, #tpu.memory_space<vmem>>, vector<1x128x128xf32>
    %3 = vector.shape_cast %2 : vector<1x128x128xf32> to vector<128x128xf32>
    %cst = arith.constant dense<0.000000e+00> : vector<64x128xf32>
    %4 = tpu.matmul %0, %3, %cst {dimension_numbers = #tpu.dot_dimension_numbers<[1], [0], [0], [1], [0, 0, 1, 1], [], []>} : vector<64x128xf32>, vector<128x128xf32>, vector<64x128xf32> -> vector<64x128xf32>
    %c0_6 = arith.constant 0 : index
    %c0_7 = arith.constant 0 : index
    %c0_8 = arith.constant 0 : index
    %5 = vector.load %arg4[%c0_6, %c0_7, %c0_8] : memref<3x1x128xf32, #tpu.memory_space<vmem>>, vector<1x1x128xf32>
    %6 = vector.shape_cast %5 : vector<1x1x128xf32> to vector<1x128xf32>
    %7 = vector.broadcast %6 : vector<1x128xf32> to vector<64x128xf32>
    %8 = arith.addf %4, %7 : vector<64x128xf32>
    %9 = arith.negf %8 : vector<64x128xf32>
    %10 = math.exp %9 : vector<64x128xf32>
    %cst_9 = arith.constant 1.000000e+00 : f32
    %11 = vector.broadcast %cst_9 : f32 to vector<64x128xf32>
    %12 = arith.addf %11, %10 : vector<64x128xf32>
    %13 = arith.divf %11, %12 : vector<64x128xf32>
    %14 = arith.subf %1, %0 : vector<64x128xf32>
    %15 = arith.mulf %13, %14 : vector<64x128xf32>
    %16 = arith.addf %0, %15 : vector<64x128xf32>
    %c1 = arith.constant 1 : index
    %c0_10 = arith.constant 0 : index
    %c0_11 = arith.constant 0 : index
    %17 = vector.load %arg3[%c1, %c0_10, %c0_11] : memref<3x128x128xf32, #tpu.memory_space<vmem>>, vector<1x128x128xf32>
    %18 = vector.shape_cast %17 : vector<1x128x128xf32> to vector<128x128xf32>
    %cst_12 = arith.constant dense<0.000000e+00> : vector<64x128xf32>
    %19 = tpu.matmul %16, %18, %cst_12 {dimension_numbers = #tpu.dot_dimension_numbers<[1], [0], [0], [1], [0, 0, 1, 1], [], []>} : vector<64x128xf32>, vector<128x128xf32>, vector<64x128xf32> -> vector<64x128xf32>
    %c1_13 = arith.constant 1 : index
    %c0_14 = arith.constant 0 : index
    %c0_15 = arith.constant 0 : index
    %20 = vector.load %arg4[%c1_13, %c0_14, %c0_15] : memref<3x1x128xf32, #tpu.memory_space<vmem>>, vector<1x1x128xf32>
    %21 = vector.shape_cast %20 : vector<1x1x128xf32> to vector<1x128xf32>
    %22 = vector.broadcast %21 : vector<1x128xf32> to vector<64x128xf32>
    %23 = arith.addf %19, %22 : vector<64x128xf32>
    %24 = arith.negf %23 : vector<64x128xf32>
    %25 = math.exp %24 : vector<64x128xf32>
    %cst_16 = arith.constant 1.000000e+00 : f32
    %26 = vector.broadcast %cst_16 : f32 to vector<64x128xf32>
    %27 = arith.addf %26, %25 : vector<64x128xf32>
    %28 = arith.divf %26, %27 : vector<64x128xf32>
    %29 = arith.subf %1, %16 : vector<64x128xf32>
    %30 = arith.mulf %28, %29 : vector<64x128xf32>
    %31 = arith.addf %16, %30 : vector<64x128xf32>
    %c2 = arith.constant 2 : index
    %c0_17 = arith.constant 0 : index
    %c0_18 = arith.constant 0 : index
    %32 = vector.load %arg3[%c2, %c0_17, %c0_18] : memref<3x128x128xf32, #tpu.memory_space<vmem>>, vector<1x128x128xf32>
    %33 = vector.shape_cast %32 : vector<1x128x128xf32> to vector<128x128xf32>
    %cst_19 = arith.constant dense<0.000000e+00> : vector<64x128xf32>
    %34 = tpu.matmul %31, %33, %cst_19 {dimension_numbers = #tpu.dot_dimension_numbers<[1], [0], [0], [1], [0, 0, 1, 1], [], []>} : vector<64x128xf32>, vector<128x128xf32>, vector<64x128xf32> -> vector<64x128xf32>
    %c2_20 = arith.constant 2 : index
    %c0_21 = arith.constant 0 : index
    %c0_22 = arith.constant 0 : index
    %35 = vector.load %arg4[%c2_20, %c0_21, %c0_22] : memref<3x1x128xf32, #tpu.memory_space<vmem>>, vector<1x1x128xf32>
    %36 = vector.shape_cast %35 : vector<1x1x128xf32> to vector<1x128xf32>
    %37 = vector.broadcast %36 : vector<1x128xf32> to vector<64x128xf32>
    %38 = arith.addf %34, %37 : vector<64x128xf32>
    %39 = arith.negf %38 : vector<64x128xf32>
    %40 = math.exp %39 : vector<64x128xf32>
    %cst_23 = arith.constant 1.000000e+00 : f32
    %41 = vector.broadcast %cst_23 : f32 to vector<64x128xf32>
    %42 = arith.addf %41, %40 : vector<64x128xf32>
    %43 = arith.divf %41, %42 : vector<64x128xf32>
    %44 = arith.subf %1, %31 : vector<64x128xf32>
    %45 = arith.mulf %43, %44 : vector<64x128xf32>
    %46 = arith.addf %31, %45 : vector<64x128xf32>
    %c0_24 = arith.constant 0 : index
    %c0_25 = arith.constant 0 : index
    %47 = vector.load %arg5[%c0_24, %c0_25] : memref<64x128xf32, #tpu.memory_space<vmem>>, vector<64x128xf32>
    tpu.vector_store %arg5[%c0_24, %c0_25], %46 {strides = array<i32>} : memref<64x128xf32, #tpu.memory_space<vmem>>, vector<64x128xf32>,
    return
  }
  func.func @transform_0(%arg0: i32) -> (i32, i32) {
    %c0_i32 = arith.constant 0 : i32
    %c0_i32_0 = arith.constant 0 : i32
    return %arg0, %c0_i32 : i32, i32
  }
  func.func @transform_1(%arg0: i32) -> (i32, i32) {
    %c0_i32 = arith.constant 0 : i32
    %c0_i32_0 = arith.constant 0 : i32
    return %arg0, %c0_i32 : i32, i32
  }
  func.func @transform_2(%arg0: i32) -> (i32, i32, i32) {
    %c0_i32 = arith.constant 0 : i32
    %c0_i32_0 = arith.constant 0 : i32
    %c0_i32_1 = arith.constant 0 : i32
    %c0_i32_2 = arith.constant 0 : i32
    return %c0_i32, %c0_i32_0, %c0_i32_1 : i32, i32, i32
  }
  func.func @transform_3(%arg0: i32) -> (i32, i32, i32) {
    %c0_i32 = arith.constant 0 : i32
    %c0_i32_0 = arith.constant 0 : i32
    %c0_i32_1 = arith.constant 0 : i32
    %c0_i32_2 = arith.constant 0 : i32
    return %c0_i32, %c0_i32_0, %c0_i32_1 : i32, i32, i32
  }
  func.func @transform_4(%arg0: i32) -> (i32, i32) {
    %c0_i32 = arith.constant 0 : i32
    %c0_i32_0 = arith.constant 0 : i32
    return %arg0, %c0_i32 : i32, i32
  }
}

</mosaic_0001>

<llo_original>
// kernel: tpu_custom_call.1
$region0: #{tpu_custom_call.1}
  #allocation0 [shape = 'u32[]', space=smem, size = 0x4, offset = 0x4, fixed_abs, tag = 'smem constant byte address 0x4 - core index']
  #allocation1 [shape = 'u32[72,128]{1,0:T(1,128)}', space=vmem, size = 0x9000, scoped, tag = 'internal scratch']
  %s0 = inlined_call_operand.hbm [shape: f32[64,128], index: 0, kind: input, shape index: {}]
  %s1 = inlined_call_operand.hbm [shape: f32[64,128], index: 1, kind: input, shape index: {}]
  %s2 = inlined_call_operand.hbm [shape: f32[3,128,128], index: 2, kind: input, shape index: {}]
  %s3 = inlined_call_operand.hbm [shape: f32[3,1,128], index: 3, kind: input, shape index: {}]
  %s4 = inlined_call_operand.hbm [shape: f32[64,128], index: 4, kind: output, shape index: {}]
  %s5 = sld [smem:[#allocation0]]
  $region42: #{tpu_custom_call.1} parent=0
    _
  %s7 = ssub.s32 1, %s5
  %s8 = scalar_select 0, %s7, %s5
  $region1: #{tpu_custom_call.1} parent=0
    #allocation2 [shape = 'u8[32768]{0}', space=vmem, size = 0x8000, scoped, tag = 'input window, operand 0, single buffered']
    #allocation3 [shape = 's32[1]{0}', space=sflag, size = 0x4, scoped, tag = 'scoped memory for tpu_custom_call.1']
    #allocation4 [shape = 's32[1]{0}', space=sflag, size = 0x4, scoped, tag = 'scoped memory for tpu_custom_call.1']
    #allocation5 [shape = 'u8[32768]{0}', space=vmem, size = 0x8000, scoped, tag = 'input window, operand 1, single buffered']
    #allocation6 [shape = 's32[1]{0}', space=sflag, size = 0x4, scoped, tag = 'scoped memory for tpu_custom_call.1']
    #allocation7 [shape = 'u8[196608]{0}', space=vmem, size = 0x30000, scoped, tag = 'input window, operand 2, single buffered']
    #allocation8 [shape = 'u8[1536]{0}', space=vmem, size = 0x800, scoped, tag = 'input window, operand 3, single buffered']
    #allocation9 [shape = 's32[1]{0}', space=sflag, size = 0x4, scoped, tag = 'scoped memory for tpu_custom_call.1']
    #allocation10 [shape = 'u8[32768]{0}', space=vmem, size = 0x8000, scoped, tag = 'output window, operand 0, single buffered']
    %9 = vsyncpa [#allocation3], 0
    %10 = vsyncpa [#allocation6], 0
    %11 = vsyncpa [#allocation9], 0
    %12 = vsyncpa [#allocation4], 0
    // Predicated region
    $region2: #{tpu_custom_call.1} parent=1 // pred_check
      _
    $region3: #{tpu_custom_call.1} parent=1 // pred_check_branch
      %14 = sbr.rel (0) target = $region5
    $region4: #{tpu_custom_call.1} parent=1 // pred_region
      %16 = vsyncadd [#allocation3], 0
      %s17 = sshll.u32 %s0, 4
      %s18 = int_to_ptr.hbm [resolvable:$true] %s17
      %s19 = sshll.u32 [#allocation2], 4
      %s20 = int_to_ptr.vmem [resolvable:$true] %s19
      %25 = dma.hbm_to_vmem [thread:$0]  %s18, 1024, %s20, [#allocation3], 128, 128, 8
    $region5: #{tpu_custom_call.1} parent=1 // pred_fallthru
      _
    // Predicated region
    $region6: #{tpu_custom_call.1} parent=1 // pred_check
      _
    $region7: #{tpu_custom_call.1} parent=1 // pred_check_branch
      %27 = sbr.rel (0) target = $region9
    $region8: #{tpu_custom_call.1} parent=1 // pred_region
      %29 = vsyncadd [#allocation6], 0
      %s30 = sshll.u32 %s1, 4
      %s31 = int_to_ptr.hbm [resolvable:$true] %s30
      %s32 = sshll.u32 [#allocation5], 4
      %s33 = int_to_ptr.vmem [resolvable:$true] %s32
      %38 = dma.hbm_to_vmem [thread:$0]  %s31, 1024, %s33, [#allocation6], 128, 128, 8
    $region9: #{tpu_custom_call.1} parent=1 // pred_fallthru
      _
    // Predicated region
    $region10: #{tpu_custom_call.1} parent=1 // pred_check
      _
    $region11: #{tpu_custom_call.1} parent=1 // pred_check_branch
      %40 = sbr.rel (0) target = $region13
    $region12: #{tpu_custom_call.1} parent=1 // pred_region
      %42 = vsyncadd [#allocation6], 0
      %s43 = sshll.u32 %s2, 4
      %s44 = int_to_ptr.hbm [resolvable:$true] %s43
      %s45 = sshll.u32 [#allocation7], 4
      %s46 = int_to_ptr.vmem [resolvable:$true] %s45
      %51 = dma.hbm_to_vmem [thread:$0]  %s44, 6144, %s46, [#allocation6], 128, 128, 8
    $region13: #{tpu_custom_call.1} parent=1 // pred_fallthru
      _
    // Predicated region
    $region14: #{tpu_custom_call.1} parent=1 // pred_check
      _
    $region15: #{tpu_custom_call.1} parent=1 // pred_check_branch
      %53 = sbr.rel (0) target = $region17
    $region16: #{tpu_custom_call.1} parent=1 // pred_region
      %55 = vsyncadd [#allocation9], 0
      %s56 = sshll.u32 %s3, 4
      %s57 = int_to_ptr.hbm [resolvable:$true] %s56
      %s58 = sshll.u32 [#allocation8], 4
      %s59 = int_to_ptr.vmem [resolvable:$true] %s58
      %64 = dma.hbm_to_vmem [thread:$0]  %s57, 48, %s59, [#allocation9], 16, 16, 1
    $region17: #{tpu_custom_call.1} parent=1 // pred_fallthru
      _
    // Predicated region
    $region18: #{tpu_custom_call.1} parent=1 // pred_check
      _
    $region19: #{tpu_custom_call.1} parent=1 // pred_check_branch
      %66 = sbr.rel (0) target = $region21
    $region20: #{tpu_custom_call.1} parent=1 // pred_region
      %68 = dma.done [#allocation3], 1024
    $region21: #{tpu_custom_call.1} parent=1 // pred_fallthru
      _
    // Predicated region
    $region22: #{tpu_custom_call.1} parent=1 // pred_check
      _
    $region23: #{tpu_custom_call.1} parent=1 // pred_check_branch
      %70 = sbr.rel (0) target = $region25
    $region24: #{tpu_custom_call.1} parent=1 // pred_region
      %72 = dma.done [#allocation6], 1024
    $region25: #{tpu_custom_call.1} parent=1 // pred_fallthru
      _
    // Predicated region
    $region26: #{tpu_custom_call.1} parent=1 // pred_check
      _
    $region27: #{tpu_custom_call.1} parent=1 // pred_check_branch
      %74 = sbr.rel (0) target = $region29
    $region28: #{tpu_custom_call.1} parent=1 // pred_region
      %76 = dma.done [#allocation6], 6144
    $region29: #{tpu_custom_call.1} parent=1 // pred_fallthru
      _
    // Predicated region
    $region30: #{tpu_custom_call.1} parent=1 // pred_check
      _
    $region31: #{tpu_custom_call.1} parent=1 // pred_check_branch
      %78 = sbr.rel (0) target = $region33
    $region32: #{tpu_custom_call.1} parent=1 // pred_region
      %80 = dma.done [#allocation9], 48
    $region33: #{tpu_custom_call.1} parent=1 // pred_fallthru
      _
    %v81 = vld [vmem:[#allocation2] sm:$0xff]
    %v82 = vld [vmem:[#allocation2 + $0x8] sm:$0xff]
    %v83 = vld [vmem:[#allocation2 + $0x10] sm:$0xff]
    %v84 = vld [vmem:[#allocation2 + $0x18] sm:$0xff]
    %v85 = vld [vmem:[#allocation2 + $0x20] sm:$0xff]
    %v86 = vld [vmem:[#allocation2 + $0x28] sm:$0xff]
    %v87 = vld [vmem:[#allocation2 + $0x30] sm:$0xff]
    %v88 = vld [vmem:[#allocation2 + $0x38] sm:$0xff]
    %v89 = vld [vmem:[#allocation5] sm:$0xff]
    %v90 = vld [vmem:[#allocation5 + $0x8] sm:$0xff]
    %v91 = vld [vmem:[#allocation5 + $0x10] sm:$0xff]
    %v92 = vld [vmem:[#allocation5 + $0x18] sm:$0xff]
    %v93 = vld [vmem:[#allocation5 + $0x20] sm:$0xff]
    %v94 = vld [vmem:[#allocation5 + $0x28] sm:$0xff]
    %v95 = vld [vmem:[#allocation5 + $0x30] sm:$0xff]
    %v96 = vld [vmem:[#allocation5 + $0x38] sm:$0xff]
    %v97 = vld [vmem:[#allocation7] sm:$0xff]
    %v98 = vld [vmem:[#allocation7 + $0x8] sm:$0xff]
    %v99 = vld [vmem:[#allocation7 + $0x10] sm:$0xff]
    %v100 = vld [vmem:[#allocation7 + $0x18] sm:$0xff]
    %v101 = vld [vmem:[#allocation7 + $0x20] sm:$0xff]
    %v102 = vld [vmem:[#allocation7 + $0x28] sm:$0xff]
    %v103 = vld [vmem:[#allocation7 + $0x30] sm:$0xff]
    %v104 = vld [vmem:[#allocation7 + $0x38] sm:$0xff]
    %v105 = vld [vmem:[#allocation7 + $0x40] sm:$0xff]
    %v106 = vld [vmem:[#allocation7 + $0x48] sm:$0xff]
    %v107 = vld [vmem:[#allocation7 + $0x50] sm:$0xff]
    %v108 = vld [vmem:[#allocation7 + $0x58] sm:$0xff]
    %v109 = vld [vmem:[#allocation7 + $0x60] sm:$0xff]
    %v110 = vld [vmem:[#allocation7 + $0x68] sm:$0xff]
    %v111 = vld [vmem:[#allocation7 + $0x70] sm:$0xff]
    %v112 = vld [vmem:[#allocation7 + $0x78] sm:$0xff]
    %v113 = vld [vmem:[#allocation8] sm:$0x1]
    %v115 = vperm.slane %v113, 0
    %117 = vmatpush.msra.mxu0 %v112
    %118 = vmatpush.msra.mxu0 %v111
    %119 = vmatpush.msra.mxu0 %v110
    %120 = vmatpush.msra.mxu0 %v109
    %121 = vmatpush.msra.mxu0 %v108
    %122 = vmatpush.msra.mxu0 %v107
    %123 = vmatpush.msra.mxu0 %v106
    %124 = vmatpush.msra.mxu0 %v105
    %125 = vmatpush.msra.mxu0 %v104
    %126 = vmatpush.msra.mxu0 %v103
    %127 = vmatpush.msra.mxu0 %v102
    %128 = vmatpush.msra.mxu0 %v101
    %129 = vmatpush.msra.mxu0 %v100
    %130 = vmatpush.msra.mxu0 %v99
    %131 = vmatpush.msra.mxu0 %v98
    %132 = vmatpush.msra.mxu0 %v97
    %133 = vmatmul.f32.gmra.mxu0 %v81
    %v134 = vpop.f32.mrf.mxu0
    %v135 = vadd.f32 %v115, %v134
    %136 = vmatmul.f32.gmra.mxu0 %v82
    %v137 = vpop.f32.mrf.mxu0
    %v138 = vadd.f32 %v115, %v137
    %139 = vmatmul.f32.gmra.mxu0 %v83
    %v140 = vpop.f32.mrf.mxu0
    %v141 = vadd.f32 %v115, %v140
    %142 = vmatmul.f32.gmra.mxu0 %v84
    %v143 = vpop.f32.mrf.mxu0
    %v144 = vadd.f32 %v115, %v143
    %145 = vmatmul.f32.gmra.mxu0 %v85
    %v146 = vpop.f32.mrf.mxu0
    %v147 = vadd.f32 %v115, %v146
    %148 = vmatmul.f32.gmra.mxu0 %v86
    %v149 = vpop.f32.mrf.mxu0
    %v150 = vadd.f32 %v115, %v149
    %151 = vmatmul.f32.gmra.mxu0 %v87
    %v152 = vpop.f32.mrf.mxu0
    %v153 = vadd.f32 %v115, %v152
    %154 = vmatmul.f32.gmra.mxu0 %v88
    %v155 = vpop.f32.mrf.mxu0
    %v156 = vadd.f32 %v115, %v155
    %157 = vdwg.mxu0
    %v158 = vxor.u32 %v135, 2147483648
    %v159 = vxor.u32 %v138, 2147483648
    %v160 = vxor.u32 %v141, 2147483648
    %v161 = vxor.u32 %v144, 2147483648
    %v162 = vxor.u32 %v147, 2147483648
    %v163 = vxor.u32 %v150, 2147483648
    %v164 = vxor.u32 %v153, 2147483648
    %v165 = vxor.u32 %v156, 2147483648
    %v166 = vmul.f32 %v158, 1.442695
    %v167 = vpow.pop %v166
    %v168 = vmul.f32 %v159, 1.442695
    %v169 = vpow.pop %v168
    %v170 = vmul.f32 %v160, 1.442695
    %v171 = vpow.pop %v170
    %v172 = vmul.f32 %v161, 1.442695
    %v173 = vpow.pop %v172
    %v174 = vmul.f32 %v162, 1.442695
    %v175 = vpow.pop %v174
    %v176 = vmul.f32 %v163, 1.442695
    %v177 = vpow.pop %v176
    %v178 = vmul.f32 %v164, 1.442695
    %v179 = vpow.pop %v178
    %v180 = vmul.f32 %v165, 1.442695
    %v181 = vpow.pop %v180
    %v182 = vadd.f32 %v167, 1.0
    %v183 = vadd.f32 %v169, 1.0
    %v184 = vadd.f32 %v171, 1.0
    %v185 = vadd.f32 %v173, 1.0
    %v186 = vadd.f32 %v175, 1.0
    %v187 = vadd.f32 %v177, 1.0
    %v188 = vadd.f32 %v179, 1.0
    %v189 = vadd.f32 %v181, 1.0
    %v190 = vrcp.pop %v182
    %v191 = vmul.f32 %v182, %v190
    %v192 = vsub.f32 1.0, %v191
    %v193 = vmul.f32 %v190, %v192
    %v194 = vadd.f32 %v190, %v193
    %vm195 = vweird.f32 %v182
    %vm196 = vweird.f32 %v190
    %vm197 = vmor %vm195, %vm196
    %v198 = vsel %vm197, %v190, %v194
    %v199 = vand.u32 2147483647, %v182
    %vm200 = vcmp.eq.f32.partialorder %v199, 8.507059e+37
    %v201 = vand.u32 %v182, 2147483648
    %v202 = vor.u32 1.1754944e-38, %v201
    %v203 = vsel %vm200, %v202, %v198
    %v204 = vmul.f32 1.0, %v203
    %v205 = vrcp.pop %v183
    %v206 = vmul.f32 %v183, %v205
    %v207 = vsub.f32 1.0, %v206
    %v208 = vmul.f32 %v205, %v207
    %v209 = vadd.f32 %v205, %v208
    %vm210 = vweird.f32 %v183
    %vm211 = vweird.f32 %v205
    %vm212 = vmor %vm210, %vm211
    %v213 = vsel %vm212, %v205, %v209
    %v214 = vand.u32 2147483647, %v183
    %vm215 = vcmp.eq.f32.partialorder %v214, 8.507059e+37
    %v216 = vand.u32 %v183, 2147483648
    %v217 = vor.u32 1.1754944e-38, %v216
    %v218 = vsel %vm215, %v217, %v213
    %v219 = vmul.f32 1.0, %v218
    %v220 = vrcp.pop %v184
    %v221 = vmul.f32 %v184, %v220
    %v222 = vsub.f32 1.0, %v221
    %v223 = vmul.f32 %v220, %v222
    %v224 = vadd.f32 %v220, %v223
    %vm225 = vweird.f32 %v184
    %vm226 = vweird.f32 %v220
    %vm227 = vmor %vm225, %vm226
    %v228 = vsel %vm227, %v220, %v224
    %v229 = vand.u32 2147483647, %v184
    %vm230 = vcmp.eq.f32.partialorder %v229, 8.507059e+37
    %v231 = vand.u32 %v184, 2147483648
    %v232 = vor.u32 1.1754944e-38, %v231
    %v233 = vsel %vm230, %v232, %v228
    %v234 = vmul.f32 1.0, %v233
    %v235 = vrcp.pop %v185
    %v236 = vmul.f32 %v185, %v235
    %v237 = vsub.f32 1.0, %v236
    %v238 = vmul.f32 %v235, %v237
    %v239 = vadd.f32 %v235, %v238
    %vm240 = vweird.f32 %v185
    %vm241 = vweird.f32 %v235
    %vm242 = vmor %vm240, %vm241
    %v243 = vsel %vm242, %v235, %v239
    %v244 = vand.u32 2147483647, %v185
    %vm245 = vcmp.eq.f32.partialorder %v244, 8.507059e+37
    %v246 = vand.u32 %v185, 2147483648
    %v247 = vor.u32 1.1754944e-38, %v246
    %v248 = vsel %vm245, %v247, %v243
    %v249 = vmul.f32 1.0, %v248
    %v250 = vrcp.pop %v186
    %v251 = vmul.f32 %v186, %v250
    %v252 = vsub.f32 1.0, %v251
    %v253 = vmul.f32 %v250, %v252
    %v254 = vadd.f32 %v250, %v253
    %vm255 = vweird.f32 %v186
    %vm256 = vweird.f32 %v250
    %vm257 = vmor %vm255, %vm256
    %v258 = vsel %vm257, %v250, %v254
    %v259 = vand.u32 2147483647, %v186
    %vm260 = vcmp.eq.f32.partialorder %v259, 8.507059e+37
    %v261 = vand.u32 %v186, 2147483648
    %v262 = vor.u32 1.1754944e-38, %v261
    %v263 = vsel %vm260, %v262, %v258
    %v264 = vmul.f32 1.0, %v263
    %v265 = vrcp.pop %v187
    %v266 = vmul.f32 %v187, %v265
    %v267 = vsub.f32 1.0, %v266
    %v268 = vmul.f32 %v265, %v267
    %v269 = vadd.f32 %v265, %v268
    %vm270 = vweird.f32 %v187
    %vm271 = vweird.f32 %v265
    %vm272 = vmor %vm270, %vm271
    %v273 = vsel %vm272, %v265, %v269
    %v274 = vand.u32 2147483647, %v187
    %vm275 = vcmp.eq.f32.partialorder %v274, 8.507059e+37
    %v276 = vand.u32 %v187, 2147483648
    %v277 = vor.u32 1.1754944e-38, %v276
    %v278 = vsel %vm275, %v277, %v273
    %v279 = vmul.f32 1.0, %v278
    %v280 = vrcp.pop %v188
    %v281 = vmul.f32 %v188, %v280
    %v282 = vsub.f32 1.0, %v281
    %v283 = vmul.f32 %v280, %v282
    %v284 = vadd.f32 %v280, %v283
    %vm285 = vweird.f32 %v188
    %vm286 = vweird.f32 %v280
    %vm287 = vmor %vm285, %vm286
    %v288 = vsel %vm287, %v280, %v284
    %v289 = vand.u32 2147483647, %v188
    %vm290 = vcmp.eq.f32.partialorder %v289, 8.507059e+37
    %v291 = vand.u32 %v188, 2147483648
    %v292 = vor.u32 1.1754944e-38, %v291
    %v293 = vsel %vm290, %v292, %v288
    %v294 = vmul.f32 1.0, %v293
    %v295 = vrcp.pop %v189
    %v296 = vmul.f32 %v189, %v295
    %v297 = vsub.f32 1.0, %v296
    %v298 = vmul.f32 %v295, %v297
    %v299 = vadd.f32 %v295, %v298
    %vm300 = vweird.f32 %v189
    %vm301 = vweird.f32 %v295
    %vm302 = vmor %vm300, %vm301
    %v303 = vsel %vm302, %v295, %v299
    %v304 = vand.u32 2147483647, %v189
    %vm305 = vcmp.eq.f32.partialorder %v304, 8.507059e+37
    %v306 = vand.u32 %v189, 2147483648
    %v307 = vor.u32 1.1754944e-38, %v306
    %v308 = vsel %vm305, %v307, %v303
    %v309 = vmul.f32 1.0, %v308
    %v310 = vsub.f32 %v89, %v81
    %v311 = vsub.f32 %v90, %v82
    %v312 = vsub.f32 %v91, %v83
    %v313 = vsub.f32 %v92, %v84
    %v314 = vsub.f32 %v93, %v85
    %v315 = vsub.f32 %v94, %v86
    %v316 = vsub.f32 %v95, %v87
    %v317 = vsub.f32 %v96, %v88
    %v318 = vmul.f32 %v204, %v310
    %v319 = vmul.f32 %v219, %v311
    %v320 = vmul.f32 %v234, %v312
    %v321 = vmul.f32 %v249, %v313
    %v322 = vmul.f32 %v264, %v314
    %v323 = vmul.f32 %v279, %v315
    %v324 = vmul.f32 %v294, %v316
    %v325 = vmul.f32 %v309, %v317
    %v326 = vadd.f32 %v81, %v318
    %v327 = vadd.f32 %v82, %v319
    %v328 = vadd.f32 %v83, %v320
    %v329 = vadd.f32 %v84, %v321
    %v330 = vadd.f32 %v85, %v322
    %v331 = vadd.f32 %v86, %v323
    %v332 = vadd.f32 %v87, %v324
    %v333 = vadd.f32 %v88, %v325
    %s334 = scalar_lea.vmem [#allocation7], 128
    %v335 = vld [vmem:[%s334] sm:$0xff]
    %v336 = vld [vmem:[%s334 + $0x8] sm:$0xff]
    %v337 = vld [vmem:[%s334 + $0x10] sm:$0xff]
    %v338 = vld [vmem:[%s334 + $0x18] sm:$0xff]
    %v339 = vld [vmem:[%s334 + $0x20] sm:$0xff]
    %v340 = vld [vmem:[%s334 + $0x28] sm:$0xff]
    %v341 = vld [vmem:[%s334 + $0x30] sm:$0xff]
    %v342 = vld [vmem:[%s334 + $0x38] sm:$0xff]
    %v343 = vld [vmem:[%s334 + $0x40] sm:$0xff]
    %v344 = vld [vmem:[%s334 + $0x48] sm:$0xff]
    %v345 = vld [vmem:[%s334 + $0x50] sm:$0xff]
    %v346 = vld [vmem:[%s334 + $0x58] sm:$0xff]
    %v347 = vld [vmem:[%s334 + $0x60] sm:$0xff]
    %v348 = vld [vmem:[%s334 + $0x68] sm:$0xff]
    %v349 = vld [vmem:[%s334 + $0x70] sm:$0xff]
    %v350 = vld [vmem:[%s334 + $0x78] sm:$0xff]
    %s351 = scalar_lea.vmem [#allocation8], 1
    %v352 = vld [vmem:[%s351] sm:$0x1]
    %v354 = vperm.slane %v352, 0
    %356 = vmatpush.msra.mxu0 %v350
    %357 = vmatpush.msra.mxu0 %v349
    %358 = vmatpush.msra.mxu0 %v348
    %359 = vmatpush.msra.mxu0 %v347
    %360 = vmatpush.msra.mxu0 %v346
    %361 = vmatpush.msra.mxu0 %v345
    %362 = vmatpush.msra.mxu0 %v344
    %363 = vmatpush.msra.mxu0 %v343
    %364 = vmatpush.msra.mxu0 %v342
    %365 = vmatpush.msra.mxu0 %v341
    %366 = vmatpush.msra.mxu0 %v340
    %367 = vmatpush.msra.mxu0 %v339
    %368 = vmatpush.msra.mxu0 %v338
    %369 = vmatpush.msra.mxu0 %v337
    %370 = vmatpush.msra.mxu0 %v336
    %371 = vmatpush.msra.mxu0 %v335
    %372 = vmatmul.f32.gmra.mxu0 %v326
    %v373 = vpop.f32.mrf.mxu0
    %v374 = vadd.f32 %v354, %v373
    %375 = vmatmul.f32.gmra.mxu0 %v327
    %v376 = vpop.f32.mrf.mxu0
    %v377 = vadd.f32 %v354, %v376
    %378 = vmatmul.f32.gmra.mxu0 %v328
    %v379 = vpop.f32.mrf.mxu0
    %v380 = vadd.f32 %v354, %v379
    %381 = vmatmul.f32.gmra.mxu0 %v329
    %v382 = vpop.f32.mrf.mxu0
    %v383 = vadd.f32 %v354, %v382
    %384 = vmatmul.f32.gmra.mxu0 %v330
    %v385 = vpop.f32.mrf.mxu0
    %v386 = vadd.f32 %v354, %v385
    %387 = vmatmul.f32.gmra.mxu0 %v331
    %v388 = vpop.f32.mrf.mxu0
    %v389 = vadd.f32 %v354, %v388
    %390 = vmatmul.f32.gmra.mxu0 %v332
    %v391 = vpop.f32.mrf.mxu0
    %v392 = vadd.f32 %v354, %v391
    %393 = vmatmul.f32.gmra.mxu0 %v333
    %v394 = vpop.f32.mrf.mxu0
    %v395 = vadd.f32 %v354, %v394
    %396 = vdwg.mxu0
    %v397 = vxor.u32 %v374, 2147483648
    %v398 = vxor.u32 %v377, 2147483648
    %v399 = vxor.u32 %v380, 2147483648
    %v400 = vxor.u32 %v383, 2147483648
    %v401 = vxor.u32 %v386, 2147483648
    %v402 = vxor.u32 %v389, 2147483648
    %v403 = vxor.u32 %v392, 2147483648
    %v404 = vxor.u32 %v395, 2147483648
    %v405 = vmul.f32 %v397, 1.442695
    %v406 = vpow.pop %v405
    %v407 = vmul.f32 %v398, 1.442695
    %v408 = vpow.pop %v407
    %v409 = vmul.f32 %v399, 1.442695
    %v410 = vpow.pop %v409
    %v411 = vmul.f32 %v400, 1.442695
    %v412 = vpow.pop %v411
    %v413 = vmul.f32 %v401, 1.442695
    %v414 = vpow.pop %v413
    %v415 = vmul.f32 %v402, 1.442695
    %v416 = vpow.pop %v415
    %v417 = vmul.f32 %v403, 1.442695
    %v418 = vpow.pop %v417
    %v419 = vmul.f32 %v404, 1.442695
    %v420 = vpow.pop %v419
    %v421 = vadd.f32 %v406, 1.0
    %v422 = vadd.f32 %v408, 1.0
    %v423 = vadd.f32 %v410, 1.0
    %v424 = vadd.f32 %v412, 1.0
    %v425 = vadd.f32 %v414, 1.0
    %v426 = vadd.f32 %v416, 1.0
    %v427 = vadd.f32 %v418, 1.0
    %v428 = vadd.f32 %v420, 1.0
    %v429 = vrcp.pop %v421
    %v430 = vmul.f32 %v421, %v429
    %v431 = vsub.f32 1.0, %v430
    %v432 = vmul.f32 %v429, %v431
    %v433 = vadd.f32 %v429, %v432
    %vm434 = vweird.f32 %v421
    %vm435 = vweird.f32 %v429
    %vm436 = vmor %vm434, %vm435
    %v437 = vsel %vm436, %v429, %v433
    %v438 = vand.u32 2147483647, %v421
    %vm439 = vcmp.eq.f32.partialorder %v438, 8.507059e+37
    %v440 = vand.u32 %v421, 2147483648
    %v441 = vor.u32 1.1754944e-38, %v440
    %v442 = vsel %vm439, %v441, %v437
    %v443 = vmul.f32 1.0, %v442
    %v444 = vrcp.pop %v422
    %v445 = vmul.f32 %v422, %v444
    %v446 = vsub.f32 1.0, %v445
    %v447 = vmul.f32 %v444, %v446
    %v448 = vadd.f32 %v444, %v447
    %vm449 = vweird.f32 %v422
    %vm450 = vweird.f32 %v444
    %vm451 = vmor %vm449, %vm450
    %v452 = vsel %vm451, %v444, %v448
    %v453 = vand.u32 2147483647, %v422
    %vm454 = vcmp.eq.f32.partialorder %v453, 8.507059e+37
    %v455 = vand.u32 %v422, 2147483648
    %v456 = vor.u32 1.1754944e-38, %v455
    %v457 = vsel %vm454, %v456, %v452
    %v458 = vmul.f32 1.0, %v457
    %v459 = vrcp.pop %v423
    %v460 = vmul.f32 %v423, %v459
    %v461 = vsub.f32 1.0, %v460
    %v462 = vmul.f32 %v459, %v461
    %v463 = vadd.f32 %v459, %v462
    %vm464 = vweird.f32 %v423
    %vm465 = vweird.f32 %v459
    %vm466 = vmor %vm464, %vm465
    %v467 = vsel %vm466, %v459, %v463
    %v468 = vand.u32 2147483647, %v423
    %vm469 = vcmp.eq.f32.partialorder %v468, 8.507059e+37
    %v470 = vand.u32 %v423, 2147483648
    %v471 = vor.u32 1.1754944e-38, %v470
    %v472 = vsel %vm469, %v471, %v467
    %v473 = vmul.f32 1.0, %v472
    %v474 = vrcp.pop %v424
    %v475 = vmul.f32 %v424, %v474
    %v476 = vsub.f32 1.0, %v475
    %v477 = vmul.f32 %v474, %v476
    %v478 = vadd.f32 %v474, %v477
    %vm479 = vweird.f32 %v424
    %vm480 = vweird.f32 %v474
    %vm481 = vmor %vm479, %vm480
    %v482 = vsel %vm481, %v474, %v478
    %v483 = vand.u32 2147483647, %v424
    %vm484 = vcmp.eq.f32.partialorder %v483, 8.507059e+37
    %v485 = vand.u32 %v424, 2147483648
    %v486 = vor.u32 1.1754944e-38, %v485
    %v487 = vsel %vm484, %v486, %v482
    %v488 = vmul.f32 1.0, %v487
    %v489 = vrcp.pop %v425
    %v490 = vmul.f32 %v425, %v489
    %v491 = vsub.f32 1.0, %v490
    %v492 = vmul.f32 %v489, %v491
    %v493 = vadd.f32 %v489, %v492
    %vm494 = vweird.f32 %v425
    %vm495 = vweird.f32 %v489
    %vm496 = vmor %vm494, %vm495
    %v497 = vsel %vm496, %v489, %v493
    %v498 = vand.u32 2147483647, %v425
    %vm499 = vcmp.eq.f32.partialorder %v498, 8.507059e+37
    %v500 = vand.u32 %v425, 2147483648
    %v501 = vor.u32 1.1754944e-38, %v500
    %v502 = vsel %vm499, %v501, %v497
    %v503 = vmul.f32 1.0, %v502
    %v504 = vrcp.pop %v426
    %v505 = vmul.f32 %v426, %v504
    %v506 = vsub.f32 1.0, %v505
    %v507 = vmul.f32 %v504, %v506
    %v508 = vadd.f32 %v504, %v507
    %vm509 = vweird.f32 %v426
    %vm510 = vweird.f32 %v504
    %vm511 = vmor %vm509, %vm510
    %v512 = vsel %vm511, %v504, %v508
    %v513 = vand.u32 2147483647, %v426
    %vm514 = vcmp.eq.f32.partialorder %v513, 8.507059e+37
    %v515 = vand.u32 %v426, 2147483648
    %v516 = vor.u32 1.1754944e-38, %v515
    %v517 = vsel %vm514, %v516, %v512
    %v518 = vmul.f32 1.0, %v517
    %v519 = vrcp.pop %v427
    %v520 = vmul.f32 %v427, %v519
    %v521 = vsub.f32 1.0, %v520
    %v522 = vmul.f32 %v519, %v521
    %v523 = vadd.f32 %v519, %v522
    %vm524 = vweird.f32 %v427
    %vm525 = vweird.f32 %v519
    %vm526 = vmor %vm524, %vm525
    %v527 = vsel %vm526, %v519, %v523
    %v528 = vand.u32 2147483647, %v427
    %vm529 = vcmp.eq.f32.partialorder %v528, 8.507059e+37
    %v530 = vand.u32 %v427, 2147483648
    %v531 = vor.u32 1.1754944e-38, %v530
    %v532 = vsel %vm529, %v531, %v527
    %v533 = vmul.f32 1.0, %v532
    %v534 = vrcp.pop %v428
    %v535 = vmul.f32 %v428, %v534
    %v536 = vsub.f32 1.0, %v535
    %v537 = vmul.f32 %v534, %v536
    %v538 = vadd.f32 %v534, %v537
    %vm539 = vweird.f32 %v428
    %vm540 = vweird.f32 %v534
    %vm541 = vmor %vm539, %vm540
    %v542 = vsel %vm541, %v534, %v538
    %v543 = vand.u32 2147483647, %v428
    %vm544 = vcmp.eq.f32.partialorder %v543, 8.507059e+37
    %v545 = vand.u32 %v428, 2147483648
    %v546 = vor.u32 1.1754944e-38, %v545
    %v547 = vsel %vm544, %v546, %v542
    %v548 = vmul.f32 1.0, %v547
    %v549 = vsub.f32 %v89, %v326
    %v550 = vsub.f32 %v90, %v327
    %v551 = vsub.f32 %v91, %v328
    %v552 = vsub.f32 %v92, %v329
    %v553 = vsub.f32 %v93, %v330
    %v554 = vsub.f32 %v94, %v331
    %v555 = vsub.f32 %v95, %v332
    %v556 = vsub.f32 %v96, %v333
    %v557 = vmul.f32 %v443, %v549
    %v558 = vmul.f32 %v458, %v550
    %v559 = vmul.f32 %v473, %v551
    %v560 = vmul.f32 %v488, %v552
    %v561 = vmul.f32 %v503, %v553
    %v562 = vmul.f32 %v518, %v554
    %v563 = vmul.f32 %v533, %v555
    %v564 = vmul.f32 %v548, %v556
    %v565 = vadd.f32 %v326, %v557
    %v566 = vadd.f32 %v327, %v558
    %v567 = vadd.f32 %v328, %v559
    %v568 = vadd.f32 %v329, %v560
    %v569 = vadd.f32 %v330, %v561
    %v570 = vadd.f32 %v331, %v562
    %v571 = vadd.f32 %v332, %v563
    %v572 = vadd.f32 %v333, %v564
    %s573 = scalar_lea.vmem [#allocation7], 256
    %v574 = vld [vmem:[%s573] sm:$0xff]
    %v575 = vld [vmem:[%s573 + $0x8] sm:$0xff]
    %v576 = vld [vmem:[%s573 + $0x10] sm:$0xff]
    %v577 = vld [vmem:[%s573 + $0x18] sm:$0xff]
    %v578 = vld [vmem:[%s573 + $0x20] sm:$0xff]
    %v579 = vld [vmem:[%s573 + $0x28] sm:$0xff]
    %v580 = vld [vmem:[%s573 + $0x30] sm:$0xff]
    %v581 = vld [vmem:[%s573 + $0x38] sm:$0xff]
    %v582 = vld [vmem:[%s573 + $0x40] sm:$0xff]
    %v583 = vld [vmem:[%s573 + $0x48] sm:$0xff]
    %v584 = vld [vmem:[%s573 + $0x50] sm:$0xff]
    %v585 = vld [vmem:[%s573 + $0x58] sm:$0xff]
    %v586 = vld [vmem:[%s573 + $0x60] sm:$0xff]
    %v587 = vld [vmem:[%s573 + $0x68] sm:$0xff]
    %v588 = vld [vmem:[%s573 + $0x70] sm:$0xff]
    %v589 = vld [vmem:[%s573 + $0x78] sm:$0xff]
    %s590 = scalar_lea.vmem [#allocation8], 2
    %v591 = vld [vmem:[%s590] sm:$0x1]
    %v593 = vperm.slane %v591, 0
    %595 = vmatpush.msra.mxu0 %v589
    %596 = vmatpush.msra.mxu0 %v588
    %597 = vmatpush.msra.mxu0 %v587
    %598 = vmatpush.msra.mxu0 %v586
    %599 = vmatpush.msra.mxu0 %v585
    %600 = vmatpush.msra.mxu0 %v584
    %601 = vmatpush.msra.mxu0 %v583
    %602 = vmatpush.msra.mxu0 %v582
    %603 = vmatpush.msra.mxu0 %v581
    %604 = vmatpush.msra.mxu0 %v580
    %605 = vmatpush.msra.mxu0 %v579
    %606 = vmatpush.msra.mxu0 %v578
    %607 = vmatpush.msra.mxu0 %v577
    %608 = vmatpush.msra.mxu0 %v576
    %609 = vmatpush.msra.mxu0 %v575
    %610 = vmatpush.msra.mxu0 %v574
    %611 = vmatmul.f32.gmra.mxu0 %v565
    %v612 = vpop.f32.mrf.mxu0
    %v613 = vadd.f32 %v593, %v612
    %614 = vmatmul.f32.gmra.mxu0 %v566
    %v615 = vpop.f32.mrf.mxu0
    %v616 = vadd.f32 %v593, %v615
    %617 = vmatmul.f32.gmra.mxu0 %v567
    %v618 = vpop.f32.mrf.mxu0
    %v619 = vadd.f32 %v593, %v618
    %620 = vmatmul.f32.gmra.mxu0 %v568
    %v621 = vpop.f32.mrf.mxu0
    %v622 = vadd.f32 %v593, %v621
    %623 = vmatmul.f32.gmra.mxu0 %v569
    %v624 = vpop.f32.mrf.mxu0
    %v625 = vadd.f32 %v593, %v624
    %626 = vmatmul.f32.gmra.mxu0 %v570
    %v627 = vpop.f32.mrf.mxu0
    %v628 = vadd.f32 %v593, %v627
    %629 = vmatmul.f32.gmra.mxu0 %v571
    %v630 = vpop.f32.mrf.mxu0
    %v631 = vadd.f32 %v593, %v630
    %632 = vmatmul.f32.gmra.mxu0 %v572
    %v633 = vpop.f32.mrf.mxu0
    %v634 = vadd.f32 %v593, %v633
    %635 = vdwg.mxu0
    %v636 = vxor.u32 %v613, 2147483648
    %v637 = vxor.u32 %v616, 2147483648
    %v638 = vxor.u32 %v619, 2147483648
    %v639 = vxor.u32 %v622, 2147483648
    %v640 = vxor.u32 %v625, 2147483648
    %v641 = vxor.u32 %v628, 2147483648
    %v642 = vxor.u32 %v631, 2147483648
    %v643 = vxor.u32 %v634, 2147483648
    %v644 = vmul.f32 %v636, 1.442695
    %v645 = vpow.pop %v644
    %v646 = vmul.f32 %v637, 1.442695
    %v647 = vpow.pop %v646
    %v648 = vmul.f32 %v638, 1.442695
    %v649 = vpow.pop %v648
    %v650 = vmul.f32 %v639, 1.442695
    %v651 = vpow.pop %v650
    %v652 = vmul.f32 %v640, 1.442695
    %v653 = vpow.pop %v652
    %v654 = vmul.f32 %v641, 1.442695
    %v655 = vpow.pop %v654
    %v656 = vmul.f32 %v642, 1.442695
    %v657 = vpow.pop %v656
    %v658 = vmul.f32 %v643, 1.442695
    %v659 = vpow.pop %v658
    %v660 = vadd.f32 %v645, 1.0
    %v661 = vadd.f32 %v647, 1.0
    %v662 = vadd.f32 %v649, 1.0
    %v663 = vadd.f32 %v651, 1.0
    %v664 = vadd.f32 %v653, 1.0
    %v665 = vadd.f32 %v655, 1.0
    %v666 = vadd.f32 %v657, 1.0
    %v667 = vadd.f32 %v659, 1.0
    %v668 = vrcp.pop %v660
    %v669 = vmul.f32 %v660, %v668
    %v670 = vsub.f32 1.0, %v669
    %v671 = vmul.f32 %v668, %v670
    %v672 = vadd.f32 %v668, %v671
    %vm673 = vweird.f32 %v660
    %vm674 = vweird.f32 %v668
    %vm675 = vmor %vm673, %vm674
    %v676 = vsel %vm675, %v668, %v672
    %v677 = vand.u32 2147483647, %v660
    %vm678 = vcmp.eq.f32.partialorder %v677, 8.507059e+37
    %v679 = vand.u32 %v660, 2147483648
    %v680 = vor.u32 1.1754944e-38, %v679
    %v681 = vsel %vm678, %v680, %v676
    %v682 = vmul.f32 1.0, %v681
    %v683 = vrcp.pop %v661
    %v684 = vmul.f32 %v661, %v683
    %v685 = vsub.f32 1.0, %v684
    %v686 = vmul.f32 %v683, %v685
    %v687 = vadd.f32 %v683, %v686
    %vm688 = vweird.f32 %v661
    %vm689 = vweird.f32 %v683
    %vm690 = vmor %vm688, %vm689
    %v691 = vsel %vm690, %v683, %v687
    %v692 = vand.u32 2147483647, %v661
    %vm693 = vcmp.eq.f32.partialorder %v692, 8.507059e+37
    %v694 = vand.u32 %v661, 2147483648
    %v695 = vor.u32 1.1754944e-38, %v694
    %v696 = vsel %vm693, %v695, %v691
    %v697 = vmul.f32 1.0, %v696
    %v698 = vrcp.pop %v662
    %v699 = vmul.f32 %v662, %v698
    %v700 = vsub.f32 1.0, %v699
    %v701 = vmul.f32 %v698, %v700
    %v702 = vadd.f32 %v698, %v701
    %vm703 = vweird.f32 %v662
    %vm704 = vweird.f32 %v698
    %vm705 = vmor %vm703, %vm704
    %v706 = vsel %vm705, %v698, %v702
    %v707 = vand.u32 2147483647, %v662
    %vm708 = vcmp.eq.f32.partialorder %v707, 8.507059e+37
    %v709 = vand.u32 %v662, 2147483648
    %v710 = vor.u32 1.1754944e-38, %v709
    %v711 = vsel %vm708, %v710, %v706
    %v712 = vmul.f32 1.0, %v711
    %v713 = vrcp.pop %v663
    %v714 = vmul.f32 %v663, %v713
    %v715 = vsub.f32 1.0, %v714
    %v716 = vmul.f32 %v713, %v715
    %v717 = vadd.f32 %v713, %v716
    %vm718 = vweird.f32 %v663
    %vm719 = vweird.f32 %v713
    %vm720 = vmor %vm718, %vm719
    %v721 = vsel %vm720, %v713, %v717
    %v722 = vand.u32 2147483647, %v663
    %vm723 = vcmp.eq.f32.partialorder %v722, 8.507059e+37
    %v724 = vand.u32 %v663, 2147483648
    %v725 = vor.u32 1.1754944e-38, %v724
    %v726 = vsel %vm723, %v725, %v721
    %v727 = vmul.f32 1.0, %v726
    %v728 = vrcp.pop %v664
    %v729 = vmul.f32 %v664, %v728
    %v730 = vsub.f32 1.0, %v729
    %v731 = vmul.f32 %v728, %v730
    %v732 = vadd.f32 %v728, %v731
    %vm733 = vweird.f32 %v664
    %vm734 = vweird.f32 %v728
    %vm735 = vmor %vm733, %vm734
    %v736 = vsel %vm735, %v728, %v732
    %v737 = vand.u32 2147483647, %v664
    %vm738 = vcmp.eq.f32.partialorder %v737, 8.507059e+37
    %v739 = vand.u32 %v664, 2147483648
    %v740 = vor.u32 1.1754944e-38, %v739
    %v741 = vsel %vm738, %v740, %v736
    %v742 = vmul.f32 1.0, %v741
    %v743 = vrcp.pop %v665
    %v744 = vmul.f32 %v665, %v743
    %v745 = vsub.f32 1.0, %v744
    %v746 = vmul.f32 %v743, %v745
    %v747 = vadd.f32 %v743, %v746
    %vm748 = vweird.f32 %v665
    %vm749 = vweird.f32 %v743
    %vm750 = vmor %vm748, %vm749
    %v751 = vsel %vm750, %v743, %v747
    %v752 = vand.u32 2147483647, %v665
    %vm753 = vcmp.eq.f32.partialorder %v752, 8.507059e+37
    %v754 = vand.u32 %v665, 2147483648
    %v755 = vor.u32 1.1754944e-38, %v754
    %v756 = vsel %vm753, %v755, %v751
    %v757 = vmul.f32 1.0, %v756
    %v758 = vrcp.pop %v666
    %v759 = vmul.f32 %v666, %v758
    %v760 = vsub.f32 1.0, %v759
    %v761 = vmul.f32 %v758, %v760
    %v762 = vadd.f32 %v758, %v761
    %vm763 = vweird.f32 %v666
    %vm764 = vweird.f32 %v758
    %vm765 = vmor %vm763, %vm764
    %v766 = vsel %vm765, %v758, %v762
    %v767 = vand.u32 2147483647, %v666
    %vm768 = vcmp.eq.f32.partialorder %v767, 8.507059e+37
    %v769 = vand.u32 %v666, 2147483648
    %v770 = vor.u32 1.1754944e-38, %v769
    %v771 = vsel %vm768, %v770, %v766
    %v772 = vmul.f32 1.0, %v771
    %v773 = vrcp.pop %v667
    %v774 = vmul.f32 %v667, %v773
    %v775 = vsub.f32 1.0, %v774
    %v776 = vmul.f32 %v773, %v775
    %v777 = vadd.f32 %v773, %v776
    %vm778 = vweird.f32 %v667
    %vm779 = vweird.f32 %v773
    %vm780 = vmor %vm778, %vm779
    %v781 = vsel %vm780, %v773, %v777
    %v782 = vand.u32 2147483647, %v667
    %vm783 = vcmp.eq.f32.partialorder %v782, 8.507059e+37
    %v784 = vand.u32 %v667, 2147483648
    %v785 = vor.u32 1.1754944e-38, %v784
    %v786 = vsel %vm783, %v785, %v781
    %v787 = vmul.f32 1.0, %v786
    %v788 = vsub.f32 %v89, %v565
    %v789 = vsub.f32 %v90, %v566
    %v790 = vsub.f32 %v91, %v567
    %v791 = vsub.f32 %v92, %v568
    %v792 = vsub.f32 %v93, %v569
    %v793 = vsub.f32 %v94, %v570
    %v794 = vsub.f32 %v95, %v571
    %v795 = vsub.f32 %v96, %v572
    %v796 = vmul.f32 %v682, %v788
    %v797 = vmul.f32 %v697, %v789
    %v798 = vmul.f32 %v712, %v790
    %v799 = vmul.f32 %v727, %v791
    %v800 = vmul.f32 %v742, %v792
    %v801 = vmul.f32 %v757, %v793
    %v802 = vmul.f32 %v772, %v794
    %v803 = vmul.f32 %v787, %v795
    %v804 = vadd.f32 %v565, %v796
    %v805 = vadd.f32 %v566, %v797
    %v806 = vadd.f32 %v567, %v798
    %v807 = vadd.f32 %v568, %v799
    %v808 = vadd.f32 %v569, %v800
    %v809 = vadd.f32 %v570, %v801
    %v810 = vadd.f32 %v571, %v802
    %v811 = vadd.f32 %v572, %v803
    %812 = vst [vmem:[#allocation10] sm:$0xff] %v804
    %813 = vst [vmem:[#allocation10 + $0x8] sm:$0xff] %v805
    %814 = vst [vmem:[#allocation10 + $0x10] sm:$0xff] %v806
    %815 = vst [vmem:[#allocation10 + $0x18] sm:$0xff] %v807
    %816 = vst [vmem:[#allocation10 + $0x20] sm:$0xff] %v808
    %817 = vst [vmem:[#allocation10 + $0x28] sm:$0xff] %v809
    %818 = vst [vmem:[#allocation10 + $0x30] sm:$0xff] %v810
    %819 = vst [vmem:[#allocation10 + $0x38] sm:$0xff] %v811
    // Predicated region
    $region34: #{tpu_custom_call.1} parent=1 // pred_check
      _
    $region35: #{tpu_custom_call.1} parent=1 // pred_check_branch
      %821 = sbr.rel (0) target = $region37
    $region36: #{tpu_custom_call.1} parent=1 // pred_region
      %823 = vsyncadd [#allocation4], 0
      %s824 = sshll.u32 [#allocation10], 4
      %s825 = int_to_ptr.vmem [resolvable:$true] %s824
      %s826 = sshll.u32 %s4, 4
      %s827 = int_to_ptr.hbm [resolvable:$true] %s826
      %832 = dma.vmem_to_hbm [thread:$0]  %s825, 1024, %s827, [#allocation4], 128, 128, 8
    $region37: #{tpu_custom_call.1} parent=1 // pred_fallthru
      _
    // Predicated region
    $region38: #{tpu_custom_call.1} parent=1 // pred_check
      _
    $region39: #{tpu_custom_call.1} parent=1 // pred_check_branch
      %834 = sbr.rel (0) target = $region41
    $region40: #{tpu_custom_call.1} parent=1 // pred_region
      %836 = dma.done [#allocation4], 1024
    $region41: #{tpu_custom_call.1} parent=1 // pred_fallthru
      _
    %837 = vsyncpa [#allocation3], 1
    %838 = vsyncpa [#allocation6], 1
    %839 = vsyncpa [#allocation9], 1
    %840 = vsyncpa [#allocation4], 1

</llo_original>
